<compile_context>
chip_gen: v7x
topology: tpu7x:2x2x1
jax: 0.10.0
libtpu: 0.0.40
codegen_flags: <defaults>
</compile_context>

<pallas_src>
import jax
import jax.numpy as jnp
from jax.experimental import pallas as pl
from jax.experimental.pallas import tpu as pltpu


def _copy_kernel(x_ref, o_ref):
    # Whole-tile copy: VMEM load + VMEM store; HBM<->VMEM DMAs are pipelined
    # by the BlockSpec machinery (double-buffered reads and writes).
    o_ref[...] = x_ref[...]


def _tiled_identity_copy(x2, tile_rows, lane):
    """Copy a (rows, lane) slab through VMEM in (tile_rows, lane) blocks."""
    rows = x2.shape[0]
    grid = (rows // tile_rows,)
    return pl.pallas_call(
        _copy_kernel,
        out_shape=jax.ShapeDtypeStruct(x2.shape, x2.dtype),
        grid=grid,
        in_specs=[pl.BlockSpec((tile_rows, lane), lambda i: (i, 0))],
        out_specs=pl.BlockSpec((tile_rows, lane), lambda i: (i, 0)),
        # Donate the input HBM buffer as the output buffer: no second HBM
        # allocation, in-place writeback.
        input_output_aliases={0: 0},
        compiler_params=pltpu.CompilerParams(
            dimension_semantics=("parallel",)
        ),
    )(x2)


@jax.jit
def amie_forward(x):
    """Identity forward of AMIE, routed through a Pallas TPU copy kernel."""
    orig_shape = x.shape
    total = x.size
    if total == 0:
        return x

    itemsize = jnp.dtype(x.dtype).itemsize
    # Sub-32-bit dtypes pack along sublanes: 8 rows (f32), 16 (bf16), 32 (i8).
    packing = max(1, 4 // itemsize)
    sublane = 8 * packing

    # Wide lane-dense last dim (multiple of 128) -> unmasked vst, fewer steps.
    lane = 512
    # ~2 MiB per block: 2 arrays x 2 double-buffers = ~8 MiB live VMEM, which
    # fits the 16 MiB default scoped VMEM on v5e and leaves ample headroom on
    # v6e/v7x.
    target_block_bytes = 2 * 1024 * 1024

    rows = pl.cdiv(total, lane)
    rows = ((rows + sublane - 1) // sublane) * sublane  # sublane-aligned

    target_rows = max(sublane, target_block_bytes // (lane * itemsize))
    target_rows = (target_rows // sublane) * sublane
    tile_rows = min(rows, target_rows)

    # Pad up to a whole number of blocks so every shape uses the pipelined
    # tiled path (no single-full-array-block VMEM cliff).
    rows_padded = ((rows + tile_rows - 1) // tile_rows) * tile_rows
    padded_total = rows_padded * lane

    x_flat = x.reshape(total)
    if padded_total != total:
        x_flat = jnp.pad(x_flat, (0, padded_total - total))
    x2 = x_flat.reshape(rows_padded, lane)

    out2 = _tiled_identity_copy(x2, tile_rows, lane)

    out_flat = out2.reshape(padded_total)
    if padded_total != total:
        out_flat = out_flat[:total]
    return out_flat.reshape(orig_shape)


if __name__ == "__main__":
    key = jax.random.PRNGKey(0)

    # Small NCHW input consistent with a conv-style module interface.
    x = jax.random.normal(key, (2, 4, 16, 16), dtype=jnp.float32)
    y = jax.block_until_ready(amie_forward(x))
    assert y.shape == x.shape and y.dtype == x.dtype
    assert bool(jnp.array_equal(y, x))

    # Awkward shape + sub-32-bit dtype exercises the padded / packed path.
    x2 = jax.random.normal(key, (3, 5, 7, 9), dtype=jnp.bfloat16)
    y2 = jax.block_until_ready(amie_forward(x2))
    assert y2.shape == x2.shape and y2.dtype == x2.dtype
    assert bool(jnp.array_equal(y2, x2))

    print("KERNEL_OK")
</pallas_src>

<mosaic_0001>
module attributes {stable_mosaic.version = 11 : i64} {
  func.func @_copy_kernel(%arg0: i32, %arg1: memref<8x512xf32, #tpu.memory_space<vmem>>, %arg2: memref<8x512xf32, #tpu.memory_space<vmem>>) attributes {dimension_semantics = [#tpu.dimension_semantics<parallel>], iteration_bounds = array<i64: 1>, scalar_prefetch = 0 : i64, scratch_operands = 0 : i64, tpu.core_type = #tpu.core_type<tc>, window_params = [{transform_indices = @transform_0, window_bounds = array<i64: 8, 512>}, {transform_indices = @transform_1, window_bounds = array<i64: 8, 512>}]} {
    %c0 = arith.constant 0 : index
    %c0_0 = arith.constant 0 : index
    %0 = vector.load %arg1[%c0, %c0_0] : memref<8x512xf32, #tpu.memory_space<vmem>>, vector<8x512xf32>
    %c0_1 = arith.constant 0 : index
    %c0_2 = arith.constant 0 : index
    %1 = vector.load %arg2[%c0_1, %c0_2] : memref<8x512xf32, #tpu.memory_space<vmem>>, vector<8x512xf32>
    tpu.vector_store %arg2[%c0_1, %c0_2], %0 {strides = array<i32>} : memref<8x512xf32, #tpu.memory_space<vmem>>, vector<8x512xf32>,
    return
  }
  func.func @transform_0(%arg0: i32) -> (i32, i32) {
    %c0_i32 = arith.constant 0 : i32
    %c0_i32_0 = arith.constant 0 : i32
    return %arg0, %c0_i32 : i32, i32
  }
  func.func @transform_1(%arg0: i32) -> (i32, i32) {
    %c0_i32 = arith.constant 0 : i32
    %c0_i32_0 = arith.constant 0 : i32
    return %arg0, %c0_i32 : i32, i32
  }
}

</mosaic_0001>

<llo_original>
// kernel: amie_forward.1
$region0: #{amie_forward.1}
  #allocation0 [shape = 'u32[]', space=smem, size = 0x4, offset = 0x4, fixed_abs, tag = 'smem constant byte address 0x4 - core index']
  #allocation1 [shape = 'u32[144,128]{1,0:T(1,128)}', space=vmem, size = 0x12000, scoped, tag = 'internal scratch']
  %s0 = inlined_call_operand.vmem [shape: f32[8,512], index: 0, kind: input, shape index: {}, may-alias: {0,1}]
  %s1 = inlined_call_operand.vmem [shape: f32[8,512], index: 1, kind: output, shape index: {}, may-alias: {0,1}]
  %s2 = sld [smem:[#allocation0]]
  $region14: #{amie_forward.1} parent=0
    _
  %s4 = ssub.s32 1, %s2
  %s5 = scalar_select 0, %s4, %s2
  // Predicated region
  $region2: #{amie_forward.1} parent=0 // pred_check
    _
  $region3: #{amie_forward.1} parent=0 // pred_check_branch
    %7 = sbr.rel (0) target = $region5
  $region4: #{amie_forward.1} parent=0 // pred_region
    _
  $region5: #{amie_forward.1} parent=0 // pred_fallthru
    _
  %v8 = vld [vmem:[%s0] sm:$0xff]
  %v9 = vld [vmem:[%s0 + $0x8] sm:$0xff]
  %v10 = vld [vmem:[%s0 + $0x10] sm:$0xff]
  %v11 = vld [vmem:[%s0 + $0x18] sm:$0xff]
  %12 = vst [vmem:[%s1] sm:$0xff] %v8
  %13 = vst [vmem:[%s1 + $0x8] sm:$0xff] %v9
  %14 = vst [vmem:[%s1 + $0x10] sm:$0xff] %v10
  %15 = vst [vmem:[%s1 + $0x18] sm:$0xff] %v11
  // Predicated region
  $region6: #{amie_forward.1} parent=0 // pred_check
    _
  $region7: #{amie_forward.1} parent=0 // pred_check_branch
    %17 = sbr.rel (0) target = $region9
  $region8: #{amie_forward.1} parent=0 // pred_region
    _
  $region9: #{amie_forward.1} parent=0 // pred_fallthru
    _
  // Predicated region
  $region10: #{amie_forward.1} parent=0 // pred_check
    _
  $region11: #{amie_forward.1} parent=0 // pred_check_branch
    %19 = sbr.rel (0) target = $region13
  $region12: #{amie_forward.1} parent=0 // pred_region
    _
  $region13: #{amie_forward.1} parent=0 // pred_fallthru
    _

</llo_original>
